<compile_context>
chip_gen: v7x
topology: tpu7x:2x2x1
jax: 0.10.0
libtpu: 0.0.40
codegen_flags: <defaults>
</compile_context>

<pallas_src>
import numpy as np
import jax
import jax.numpy as jnp
from jax.experimental import pallas as pl
from jax.experimental.pallas import tpu as pltpu

IN_SIZE = 768          # hard-coded by x.reshape(-1, batch_size, 768) in the torch forward
ROW_TILE = 512         # flat-row tile: >=512 rows reaches ~85% of HBM roofline, tiny in VMEM (bf16)


def _pred_kernel(x_ref, segid_ref, w1_ref, b1_ref, w2_ref, b2_ref, x1_ref):
    t = pl.program_id(0)

    # resident (B, out) running-max accumulator across row tiles
    @pl.when(t == 0)
    def _init():
        x1_ref[...] = jnp.full(x1_ref.shape, -jnp.inf, x1_ref.dtype)

    # MLP: lin1 -> ReLU -> lin2  (bf16 operands on the MXU, f32 accumulation)
    x = x_ref[...]                                                       # (TM, 768) bf16
    h = jnp.dot(x, w1_ref[...], preferred_element_type=jnp.float32) + b1_ref[...]
    h = jnp.maximum(h, 0.0)
    y = jnp.dot(h.astype(w2_ref.dtype), w2_ref[...],
                preferred_element_type=jnp.float32) + b2_ref[...]        # (TM, out) f32

    # per-batch segment max.  segid[r] == b  iff flat row r lies in batch b's slice
    # (torch: x_0[b][bl[b] : bl[b] + bl[b+1]]); -1 marks rows outside every slice
    # (also used to neutralize the padded rows of a partial last tile).
    seg_id = segid_ref[...]                                              # (TM, 1) int32
    B = x1_ref.shape[0]
    for b in range(B):                                                   # static, small B -> unrolled
        masked = jnp.where(seg_id == b, y, -jnp.inf)
        seg_max = jnp.max(masked, axis=0, keepdims=True)                 # (1, out)
        x1_ref[pl.ds(b, 1), :] = jnp.maximum(x1_ref[pl.ds(b, 1), :], seg_max)


def prediction_layer(x, batch_list, batch_size, params):
    """JAX/Pallas equivalent of Prediction_layer.forward(x, batch_list, batch_size)."""
    w1, b1, w2, b2 = params
    mid = w1.shape[1]
    out = w2.shape[1]
    B = int(batch_size)

    # layout glue: torch does reshape(-1, B, 768).transpose(0, 1).  We keep the flat
    # row-major (N*B, 768) view instead (free reshape) -> no HBM transpose pass.
    # Flat row m <-> (position n = m // B, batch b = m % B).
    x2 = jnp.reshape(x, (-1, IN_SIZE)).astype(jnp.bfloat16)              # (M, 768)
    M = x2.shape[0]
    N = M // B

    w1b = jnp.asarray(w1, jnp.bfloat16)
    w2b = jnp.asarray(w2, jnp.bfloat16)
    b1f = jnp.asarray(b1, jnp.float32).reshape(1, mid)
    b2f = jnp.asarray(b2, jnp.float32).reshape(1, out)

    # torch quirk: batch_list.insert(0, 0); start_i = bl[i], len_i = bl[i+1]
    bl = [0] + [int(v) for v in batch_list]
    starts, lens = [], []
    for i in range(B):
        s = max(0, min(bl[i], N))
        l = max(0, min(bl[i + 1], N - s))          # torch slicing truncates at N
        starts.append(s)
        lens.append(l)

    # flat-row tiling + static restriction to the tile range covered by the segments
    TM = M if M <= ROW_TILE else ROW_TILE
    n_blocks_total = -(-M // TM)
    lo_flat = min([starts[i] * B for i in range(B) if lens[i] > 0], default=0)
    hi_flat = max([(starts[i] + lens[i]) * B for i in range(B) if lens[i] > 0], default=0)
    blk0 = lo_flat // TM
    num_tiles = max(1, -(-hi_flat // TM) - blk0)

    # per-flat-row segment id, padded with -1 past M so OOB rows of a partial tile are ignored
    seg_np = np.full((n_blocks_total * TM, 1), -1, np.int32)
    for bidx in range(B):
        if lens[bidx] > 0:
            rows = np.arange(starts[bidx], starts[bidx] + lens[bidx]) * B + bidx
            seg_np[rows, 0] = bidx
    seg_id = jnp.asarray(seg_np)

    x1 = pl.pallas_call(
        _pred_kernel,
        out_shape=jax.ShapeDtypeStruct((B, out), jnp.float32),
        grid=(num_tiles,),
        in_specs=[
            pl.BlockSpec((TM, IN_SIZE), lambda t: (blk0 + t, 0)),        # x rows (segment range only)
            pl.BlockSpec((TM, 1), lambda t: (blk0 + t, 0)),              # per-row segment id
            pl.BlockSpec((IN_SIZE, mid), lambda t: (0, 0)),              # w1 (resident in VMEM)
            pl.BlockSpec((1, mid), lambda t: (0, 0)),                    # b1
            pl.BlockSpec((mid, out), lambda t: (0, 0)),                  # w2
            pl.BlockSpec((1, out), lambda t: (0, 0)),                    # b2
        ],
        out_specs=pl.BlockSpec((B, out), lambda t: (0, 0)),              # resident accumulator
        compiler_params=pltpu.CompilerParams(
            dimension_semantics=("arbitrary",),                          # running-max reduction axis
            vmem_limit_bytes=32 * 1024 * 1024,
        ),
    )(x2, seg_id, w1b, b1f, w2b, b2f)

    # torch: F.softmax(x_1, -1).max(-1)[1]  ==  argmax(x_1)  (softmax is monotonic)
    x1_probs = jnp.argmax(x1, axis=-1)
    # TODO(synk): dropout is declared in the torch module but never applied in forward; omitted.
    # NOTE: a zero-length segment yields a -inf row here; torch would raise on an empty max.
    return x1, x1_probs


if __name__ == "__main__":
    key = jax.random.PRNGKey(0)
    batch_size, N = 2, 8
    mid_size, out_size = 32, 16

    k1, k2, k3, k4, k5 = jax.random.split(key, 5)
    x = jax.random.normal(k1, (N, batch_size, IN_SIZE), jnp.float32)
    # deterministic synthetic parameters (Linear(768, mid), Linear(mid, out))
    w1 = jax.random.normal(k2, (IN_SIZE, mid_size), jnp.float32) / np.sqrt(IN_SIZE)
    b1 = jax.random.normal(k3, (1, mid_size), jnp.float32) * 0.1
    w2 = jax.random.normal(k4, (mid_size, out_size), jnp.float32) / np.sqrt(mid_size)
    b2 = jax.random.normal(k5, (1, out_size), jnp.float32) * 0.1

    batch_list = [3, 4]   # torch: bl.insert(0,0); slice i = [bl[i] : bl[i] + bl[i+1])

    x1, probs = prediction_layer(x, batch_list, batch_size, (w1, b1, w2, b2))
    (x1, probs) = jax.block_until_ready((x1, probs))

    # pure-JAX reference using the same bf16 rounding as the kernel (f32 accumulation)
    xt = jnp.transpose(jnp.reshape(x, (-1, batch_size, IN_SIZE)), (1, 0, 2))   # (B, N, 768)
    xtb = xt.astype(jnp.bfloat16).astype(jnp.float32)
    w1f = w1.astype(jnp.bfloat16).astype(jnp.float32)
    w2f = w2.astype(jnp.bfloat16).astype(jnp.float32)
    h = jnp.maximum(xtb @ w1f + b1, 0.0).astype(jnp.bfloat16).astype(jnp.float32)
    y = h @ w2f + b2
    bl = [0] + list(batch_list)
    ref_rows = [jnp.max(y[i, bl[i]:bl[i] + bl[i + 1], :], axis=0) for i in range(batch_size)]
    x1_ref = jnp.stack(ref_rows)
    probs_ref = jnp.argmax(x1_ref, axis=-1)

    assert np.allclose(np.asarray(x1), np.asarray(x1_ref), rtol=1e-2, atol=1e-2), \
        np.max(np.abs(np.asarray(x1) - np.asarray(x1_ref)))
    assert np.array_equal(np.asarray(probs), np.asarray(probs_ref))
    print("KERNEL_OK")
</pallas_src>

<mosaic_0001>
module attributes {stable_mosaic.version = 11 : i64} {
  func.func @_pred_kernel(%arg0: i32, %arg1: memref<16x768xbf16, #tpu.memory_space<vmem>>, %arg2: memref<16x1xi32, #tpu.memory_space<vmem>>, %arg3: memref<768x32xbf16, #tpu.memory_space<vmem>>, %arg4: memref<1x32xf32, #tpu.memory_space<vmem>>, %arg5: memref<32x16xbf16, #tpu.memory_space<vmem>>, %arg6: memref<1x16xf32, #tpu.memory_space<vmem>>, %arg7: memref<2x16xf32, #tpu.memory_space<vmem>>) attributes {dimension_semantics = [#tpu.dimension_semantics<arbitrary>], iteration_bounds = array<i64: 1>, scalar_prefetch = 0 : i64, scratch_operands = 0 : i64, tpu.core_type = #tpu.core_type<tc>, window_params = [{transform_indices = @transform_0, window_bounds = array<i64: 16, 768>}, {transform_indices = @transform_1, window_bounds = array<i64: 16, 1>}, {pipeline_mode = #tpu.pipeline_mode<synchronous>, transform_indices = @transform_2, window_bounds = array<i64: 768, 32>}, {pipeline_mode = #tpu.pipeline_mode<synchronous>, transform_indices = @transform_3, window_bounds = array<i64: 1, 32>}, {pipeline_mode = #tpu.pipeline_mode<synchronous>, transform_indices = @transform_4, window_bounds = array<i64: 32, 16>}, {pipeline_mode = #tpu.pipeline_mode<synchronous>, transform_indices = @transform_5, window_bounds = array<i64: 1, 16>}, {pipeline_mode = #tpu.pipeline_mode<synchronous>, transform_indices = @transform_6, window_bounds = array<i64: 2, 16>}]} {
    %c0_i32 = arith.constant 0 : i32
    %0 = arith.cmpi eq, %arg0, %c0_i32 : i32
    %1 = arith.extui %0 : i1 to i32
    %c0_i32_0 = arith.constant 0 : i32
    %2 = arith.cmpi ne, %1, %c0_i32_0 : i32
    scf.if %2 {
      %cst_26 = arith.constant 0xFF800000 : f32
      %40 = vector.broadcast %cst_26 : f32 to vector<2x16xf32>
      %c0_27 = arith.constant 0 : index
      %c0_28 = arith.constant 0 : index
      %41 = vector.load %arg7[%c0_27, %c0_28] : memref<2x16xf32, #tpu.memory_space<vmem>>, vector<2x16xf32>
      tpu.vector_store %arg7[%c0_27, %c0_28], %40 {strides = array<i32>} : memref<2x16xf32, #tpu.memory_space<vmem>>, vector<2x16xf32>,
    } else {
    }
    %c0 = arith.constant 0 : index
    %c0_1 = arith.constant 0 : index
    %3 = vector.load %arg1[%c0, %c0_1] : memref<16x768xbf16, #tpu.memory_space<vmem>>, vector<16x768xbf16>
    %c0_2 = arith.constant 0 : index
    %c0_3 = arith.constant 0 : index
    %4 = vector.load %arg3[%c0_2, %c0_3] : memref<768x32xbf16, #tpu.memory_space<vmem>>, vector<768x32xbf16>
    %cst = arith.constant dense<0.000000e+00> : vector<16x32xf32>
    %5 = tpu.matmul %3, %4, %cst {dimension_numbers = #tpu.dot_dimension_numbers<[1], [0], [0], [1], [0, 0, 1, 1], [], []>} : vector<16x768xbf16>, vector<768x32xbf16>, vector<16x32xf32> -> vector<16x32xf32>
    %c0_4 = arith.constant 0 : index
    %c0_5 = arith.constant 0 : index
    %6 = vector.load %arg4[%c0_4, %c0_5] : memref<1x32xf32, #tpu.memory_space<vmem>>, vector<1x32xf32>
    %7 = vector.broadcast %6 : vector<1x32xf32> to vector<16x32xf32>
    %8 = arith.addf %5, %7 : vector<16x32xf32>
    %cst_6 = arith.constant 0.000000e+00 : f32
    %9 = vector.broadcast %cst_6 : f32 to vector<16x32xf32>
    %10 = arith.maximumf %8, %9 : vector<16x32xf32>
    %11 = arith.truncf %10 : vector<16x32xf32> to vector<16x32xbf16>
    %c0_7 = arith.constant 0 : index
    %c0_8 = arith.constant 0 : index
    %12 = vector.load %arg5[%c0_7, %c0_8] : memref<32x16xbf16, #tpu.memory_space<vmem>>, vector<32x16xbf16>
    %cst_9 = arith.constant dense<0.000000e+00> : vector<16x16xf32>
    %13 = tpu.matmul %11, %12, %cst_9 {dimension_numbers = #tpu.dot_dimension_numbers<[1], [0], [0], [1], [0, 0, 1, 1], [], []>} : vector<16x32xbf16>, vector<32x16xbf16>, vector<16x16xf32> -> vector<16x16xf32>
    %c0_10 = arith.constant 0 : index
    %c0_11 = arith.constant 0 : index
    %14 = vector.load %arg6[%c0_10, %c0_11] : memref<1x16xf32, #tpu.memory_space<vmem>>, vector<1x16xf32>
    %15 = vector.broadcast %14 : vector<1x16xf32> to vector<16x16xf32>
    %16 = arith.addf %13, %15 : vector<16x16xf32>
    %c0_12 = arith.constant 0 : index
    %c0_13 = arith.constant 0 : index
    %17 = vector.load %arg2[%c0_12, %c0_13] : memref<16x1xi32, #tpu.memory_space<vmem>>, vector<16x1xi32>
    %c0_i32_14 = arith.constant 0 : i32
    %18 = vector.broadcast %c0_i32_14 : i32 to vector<16x1xi32>
    %19 = arith.cmpi eq, %17, %18 : vector<16x1xi32>
    %cst_15 = arith.constant 0xFF800000 : f32
    %20 = vector.shape_cast %19 : vector<16x1xi1> to vector<16x1xi1>
    %21 = vector.broadcast %20 : vector<16x1xi1> to vector<16x16xi1>
    %22 = vector.broadcast %cst_15 : f32 to vector<16x16xf32>
    %23 = arith.select %21, %16, %22 : vector<16x16xi1>, vector<16x16xf32>
    %cst_16 = arith.constant dense<0xFF800000> : vector<16xf32>
    %24 = vector.multi_reduction <maximumf>, %23, %cst_16 [0] : vector<16x16xf32> to vector<16xf32>
    %25 = vector.shape_cast %24 : vector<16xf32> to vector<1x16xf32>
    %c0_17 = arith.constant 0 : index
    %c0_18 = arith.constant 0 : index
    %26 = vector.load %arg7[%c0_17, %c0_18] : memref<2x16xf32, #tpu.memory_space<vmem>>, vector<1x16xf32>
    %27 = arith.maximumf %26, %25 : vector<1x16xf32>
    %c0_19 = arith.constant 0 : index
    %c0_20 = arith.constant 0 : index
    %28 = vector.load %arg7[%c0_19, %c0_20] : memref<2x16xf32, #tpu.memory_space<vmem>>, vector<1x16xf32>
    tpu.vector_store %arg7[%c0_19, %c0_20], %27 {strides = array<i32>} : memref<2x16xf32, #tpu.memory_space<vmem>>, vector<1x16xf32>,
    %c1_i32 = arith.constant 1 : i32
    %29 = vector.broadcast %c1_i32 : i32 to vector<16x1xi32>
    %30 = arith.cmpi eq, %17, %29 : vector<16x1xi32>
    %cst_21 = arith.constant 0xFF800000 : f32
    %31 = vector.shape_cast %30 : vector<16x1xi1> to vector<16x1xi1>
    %32 = vector.broadcast %31 : vector<16x1xi1> to vector<16x16xi1>
    %33 = vector.broadcast %cst_21 : f32 to vector<16x16xf32>
    %34 = arith.select %32, %16, %33 : vector<16x16xi1>, vector<16x16xf32>
    %cst_22 = arith.constant dense<0xFF800000> : vector<16xf32>
    %35 = vector.multi_reduction <maximumf>, %34, %cst_22 [0] : vector<16x16xf32> to vector<16xf32>
    %36 = vector.shape_cast %35 : vector<16xf32> to vector<1x16xf32>
    %c1 = arith.constant 1 : index
    %c0_23 = arith.constant 0 : index
    %37 = vector.load %arg7[%c1, %c0_23] : memref<2x16xf32, #tpu.memory_space<vmem>>, vector<1x16xf32>
    %38 = arith.maximumf %37, %36 : vector<1x16xf32>
    %c1_24 = arith.constant 1 : index
    %c0_25 = arith.constant 0 : index
    %39 = vector.load %arg7[%c1_24, %c0_25] : memref<2x16xf32, #tpu.memory_space<vmem>>, vector<1x16xf32>
    tpu.vector_store %arg7[%c1_24, %c0_25], %38 {strides = array<i32>} : memref<2x16xf32, #tpu.memory_space<vmem>>, vector<1x16xf32>,
    return
  }
  func.func @transform_0(%arg0: i32) -> (i32, i32) {
    %c0_i32 = arith.constant 0 : i32
    %0 = arith.addi %c0_i32, %arg0 : i32
    %c0_i32_0 = arith.constant 0 : i32
    %c0_i32_1 = arith.constant 0 : i32
    return %0, %c0_i32_0 : i32, i32
  }
  func.func @transform_1(%arg0: i32) -> (i32, i32) {
    %c0_i32 = arith.constant 0 : i32
    %0 = arith.addi %c0_i32, %arg0 : i32
    %c0_i32_0 = arith.constant 0 : i32
    %c0_i32_1 = arith.constant 0 : i32
    return %0, %c0_i32_0 : i32, i32
  }
  func.func @transform_2(%arg0: i32) -> (i32, i32) {
    %c0_i32 = arith.constant 0 : i32
    %c0_i32_0 = arith.constant 0 : i32
    %c0_i32_1 = arith.constant 0 : i32
    return %c0_i32, %c0_i32_0 : i32, i32
  }
  func.func @transform_3(%arg0: i32) -> (i32, i32) {
    %c0_i32 = arith.constant 0 : i32
    %c0_i32_0 = arith.constant 0 : i32
    %c0_i32_1 = arith.constant 0 : i32
    return %c0_i32, %c0_i32_0 : i32, i32
  }
  func.func @transform_4(%arg0: i32) -> (i32, i32) {
    %c0_i32 = arith.constant 0 : i32
    %c0_i32_0 = arith.constant 0 : i32
    %c0_i32_1 = arith.constant 0 : i32
    return %c0_i32, %c0_i32_0 : i32, i32
  }
  func.func @transform_5(%arg0: i32) -> (i32, i32) {
    %c0_i32 = arith.constant 0 : i32
    %c0_i32_0 = arith.constant 0 : i32
    %c0_i32_1 = arith.constant 0 : i32
    return %c0_i32, %c0_i32_0 : i32, i32
  }
  func.func @transform_6(%arg0: i32) -> (i32, i32) {
    %c0_i32 = arith.constant 0 : i32
    %c0_i32_0 = arith.constant 0 : i32
    %c0_i32_1 = arith.constant 0 : i32
    return %c0_i32, %c0_i32_0 : i32, i32
  }
}

</mosaic_0001>

<llo_original>
// kernel: tpu_custom_call.1
$region0: #{tpu_custom_call.1}
  #allocation0 [shape = 'u32[]', space=smem, size = 0x4, offset = 0x4, fixed_abs, tag = 'smem constant byte address 0x4 - core index']
  #allocation1 [shape = 'u32[144,128]{1,0:T(1,128)}', space=vmem, size = 0x12000, scoped, tag = 'internal scratch']
  %s0 = inlined_call_operand.vmem [shape: bf16[16,768], index: 0, kind: input, shape index: {}]
  %s1 = inlined_call_operand.vmem [shape: s32[16,1], index: 1, kind: input, shape index: {}]
  %s2 = inlined_call_operand.vmem [shape: bf16[768,32], index: 2, kind: input, shape index: {}]
  %s3 = inlined_call_operand.vmem [shape: f32[1,32], index: 3, kind: input, shape index: {}]
  %s4 = inlined_call_operand.vmem [shape: bf16[32,16], index: 4, kind: input, shape index: {}]
  %s5 = inlined_call_operand.vmem [shape: f32[1,16], index: 5, kind: input, shape index: {}]
  %s6 = inlined_call_operand.hbm [shape: f32[2,16], index: 6, kind: output, shape index: {}]
  %s7 = sld [smem:[#allocation0]]
  $region38: #{tpu_custom_call.1} parent=0
    _
  %s9 = ssub.s32 1, %s7
  %s10 = scalar_select 0, %s9, %s7
  $region1: #{tpu_custom_call.1} parent=0
    #allocation2 [shape = 'u8[1024]{0}', space=vmem, size = 0x400, scoped, tag = 'output window, operand 0, single buffered']
    #allocation3 [shape = 's32[1]{0}', space=sflag, size = 0x4, scoped, tag = 'scoped memory for tpu_custom_call.1']
    %11 = vsyncpa [#allocation3], 0
    // Predicated region
    $region2: #{tpu_custom_call.1} parent=1 // pred_check
      _
    $region3: #{tpu_custom_call.1} parent=1 // pred_check_branch
      %13 = sbr.rel (0) target = $region5
    $region4: #{tpu_custom_call.1} parent=1 // pred_region
      _
    $region5: #{tpu_custom_call.1} parent=1 // pred_fallthru
      _
    // Predicated region
    $region6: #{tpu_custom_call.1} parent=1 // pred_check
      _
    $region7: #{tpu_custom_call.1} parent=1 // pred_check_branch
      %15 = sbr.rel (0) target = $region9
    $region8: #{tpu_custom_call.1} parent=1 // pred_region
      _
    $region9: #{tpu_custom_call.1} parent=1 // pred_fallthru
      _
    // Predicated region
    $region10: #{tpu_custom_call.1} parent=1 // pred_check
      _
    $region11: #{tpu_custom_call.1} parent=1 // pred_check_branch
      %17 = sbr.rel (0) target = $region13
    $region12: #{tpu_custom_call.1} parent=1 // pred_region
      _
    $region13: #{tpu_custom_call.1} parent=1 // pred_fallthru
      _
    // Predicated region
    $region14: #{tpu_custom_call.1} parent=1 // pred_check
      _
    $region15: #{tpu_custom_call.1} parent=1 // pred_check_branch
      %19 = sbr.rel (0) target = $region17
    $region16: #{tpu_custom_call.1} parent=1 // pred_region
      _
    $region17: #{tpu_custom_call.1} parent=1 // pred_fallthru
      _
    // Predicated region
    $region18: #{tpu_custom_call.1} parent=1 // pred_check
      _
    $region19: #{tpu_custom_call.1} parent=1 // pred_check_branch
      %21 = sbr.rel (0) target = $region21
    $region20: #{tpu_custom_call.1} parent=1 // pred_region
      _
    $region21: #{tpu_custom_call.1} parent=1 // pred_fallthru
      _
    // Predicated region
    $region22: #{tpu_custom_call.1} parent=1 // pred_check
      _
    $region23: #{tpu_custom_call.1} parent=1 // pred_check_branch
      %23 = sbr.rel (0) target = $region25
    $region24: #{tpu_custom_call.1} parent=1 // pred_region
      _
    $region25: #{tpu_custom_call.1} parent=1 // pred_fallthru
      _
    %p25 = scmp.eq.s32.totalorder 0, 0
    // Predicated region
    $region26: #{tpu_custom_call.1} parent=1 // pred_check
      %p26 = pneg %p25
    $region27: #{tpu_custom_call.1} parent=1 // pred_check_branch
      %28 = sbr.rel (%p26) target = $region29
    $region28: #{tpu_custom_call.1} parent=1 // pred_region
      %vm29 = vcmask 123904
      %30 = vst.msk [vmem:[#allocation2] sm:$0x3] %vm29, -inf
    $region29: #{tpu_custom_call.1} parent=1 // pred_fallthru
      _
    %v31 = vld [vmem:[%s0] sm:$0xff]
    %v32 = vld [vmem:[%s0 + $0x8] sm:$0xff]
    %v33 = vld [vmem:[%s0 + $0x10] sm:$0xff]
    %v34 = vld [vmem:[%s0 + $0x18] sm:$0xff]
    %v35 = vld [vmem:[%s0 + $0x20] sm:$0xff]
    %v36 = vld [vmem:[%s0 + $0x28] sm:$0xff]
    %v37 = vld [vmem:[%s2] sm:$0xf]
    %v38 = vld [vmem:[%s2 + $0x4] sm:$0xf]
    %v39 = vld [vmem:[%s2 + $0x8] sm:$0xf]
    %v40 = vld [vmem:[%s2 + $0xc] sm:$0xf]
    %v41 = vld [vmem:[%s2 + $0x10] sm:$0xf]
    %v42 = vld [vmem:[%s2 + $0x14] sm:$0xf]
    %v43 = vld [vmem:[%s2 + $0x18] sm:$0xf]
    %v44 = vld [vmem:[%s2 + $0x1c] sm:$0xf]
    %v45 = vld [vmem:[%s2 + $0x20] sm:$0xf]
    %v46 = vld [vmem:[%s2 + $0x24] sm:$0xf]
    %v47 = vld [vmem:[%s2 + $0x28] sm:$0xf]
    %v48 = vld [vmem:[%s2 + $0x2c] sm:$0xf]
    %v49 = vld [vmem:[%s2 + $0x30] sm:$0xf]
    %v50 = vld [vmem:[%s2 + $0x34] sm:$0xf]
    %v51 = vld [vmem:[%s2 + $0x38] sm:$0xf]
    %v52 = vld [vmem:[%s2 + $0x3c] sm:$0xf]
    %v53 = vld [vmem:[%s2 + $0x40] sm:$0xf]
    %v54 = vld [vmem:[%s2 + $0x44] sm:$0xf]
    %v55 = vld [vmem:[%s2 + $0x48] sm:$0xf]
    %v56 = vld [vmem:[%s2 + $0x4c] sm:$0xf]
    %v57 = vld [vmem:[%s2 + $0x50] sm:$0xf]
    %v58 = vld [vmem:[%s2 + $0x54] sm:$0xf]
    %v59 = vld [vmem:[%s2 + $0x58] sm:$0xf]
    %v60 = vld [vmem:[%s2 + $0x5c] sm:$0xf]
    %v61 = vld [vmem:[%s2 + $0x60] sm:$0xf]
    %v62 = vld [vmem:[%s2 + $0x64] sm:$0xf]
    %v63 = vld [vmem:[%s2 + $0x68] sm:$0xf]
    %v64 = vld [vmem:[%s2 + $0x6c] sm:$0xf]
    %v65 = vld [vmem:[%s2 + $0x70] sm:$0xf]
    %v66 = vld [vmem:[%s2 + $0x74] sm:$0xf]
    %v67 = vld [vmem:[%s2 + $0x78] sm:$0xf]
    %v68 = vld [vmem:[%s2 + $0x7c] sm:$0xf]
    %v69 = vld [vmem:[%s2 + $0x80] sm:$0xf]
    %v70 = vld [vmem:[%s2 + $0x84] sm:$0xf]
    %v71 = vld [vmem:[%s2 + $0x88] sm:$0xf]
    %v72 = vld [vmem:[%s2 + $0x8c] sm:$0xf]
    %v73 = vld [vmem:[%s2 + $0x90] sm:$0xf]
    %v74 = vld [vmem:[%s2 + $0x94] sm:$0xf]
    %v75 = vld [vmem:[%s2 + $0x98] sm:$0xf]
    %v76 = vld [vmem:[%s2 + $0x9c] sm:$0xf]
    %v77 = vld [vmem:[%s2 + $0xa0] sm:$0xf]
    %v78 = vld [vmem:[%s2 + $0xa4] sm:$0xf]
    %v79 = vld [vmem:[%s2 + $0xa8] sm:$0xf]
    %v80 = vld [vmem:[%s2 + $0xac] sm:$0xf]
    %v81 = vld [vmem:[%s2 + $0xb0] sm:$0xf]
    %v82 = vld [vmem:[%s2 + $0xb4] sm:$0xf]
    %v83 = vld [vmem:[%s2 + $0xb8] sm:$0xf]
    %v84 = vld [vmem:[%s2 + $0xbc] sm:$0xf]
    %v85 = vld [vmem:[%s2 + $0xc0] sm:$0xf]
    %v86 = vld [vmem:[%s2 + $0xc4] sm:$0xf]
    %v87 = vld [vmem:[%s2 + $0xc8] sm:$0xf]
    %v88 = vld [vmem:[%s2 + $0xcc] sm:$0xf]
    %v89 = vld [vmem:[%s2 + $0xd0] sm:$0xf]
    %v90 = vld [vmem:[%s2 + $0xd4] sm:$0xf]
    %v91 = vld [vmem:[%s2 + $0xd8] sm:$0xf]
    %v92 = vld [vmem:[%s2 + $0xdc] sm:$0xf]
    %v93 = vld [vmem:[%s2 + $0xe0] sm:$0xf]
    %v94 = vld [vmem:[%s2 + $0xe4] sm:$0xf]
    %v95 = vld [vmem:[%s2 + $0xe8] sm:$0xf]
    %v96 = vld [vmem:[%s2 + $0xec] sm:$0xf]
    %v97 = vld [vmem:[%s2 + $0xf0] sm:$0xf]
    %v98 = vld [vmem:[%s2 + $0xf4] sm:$0xf]
    %v99 = vld [vmem:[%s2 + $0xf8] sm:$0xf]
    %v100 = vld [vmem:[%s2 + $0xfc] sm:$0xf]
    %v101 = vld [vmem:[%s2 + $0x100] sm:$0xf]
    %v102 = vld [vmem:[%s2 + $0x104] sm:$0xf]
    %v103 = vld [vmem:[%s2 + $0x108] sm:$0xf]
    %v104 = vld [vmem:[%s2 + $0x10c] sm:$0xf]
    %v105 = vld [vmem:[%s2 + $0x110] sm:$0xf]
    %v106 = vld [vmem:[%s2 + $0x114] sm:$0xf]
    %v107 = vld [vmem:[%s2 + $0x118] sm:$0xf]
    %v108 = vld [vmem:[%s2 + $0x11c] sm:$0xf]
    %v109 = vld [vmem:[%s2 + $0x120] sm:$0xf]
    %v110 = vld [vmem:[%s2 + $0x124] sm:$0xf]
    %v111 = vld [vmem:[%s2 + $0x128] sm:$0xf]
    %v112 = vld [vmem:[%s2 + $0x12c] sm:$0xf]
    %v113 = vld [vmem:[%s2 + $0x130] sm:$0xf]
    %v114 = vld [vmem:[%s2 + $0x134] sm:$0xf]
    %v115 = vld [vmem:[%s2 + $0x138] sm:$0xf]
    %v116 = vld [vmem:[%s2 + $0x13c] sm:$0xf]
    %v117 = vld [vmem:[%s2 + $0x140] sm:$0xf]
    %v118 = vld [vmem:[%s2 + $0x144] sm:$0xf]
    %v119 = vld [vmem:[%s2 + $0x148] sm:$0xf]
    %v120 = vld [vmem:[%s2 + $0x14c] sm:$0xf]
    %v121 = vld [vmem:[%s2 + $0x150] sm:$0xf]
    %v122 = vld [vmem:[%s2 + $0x154] sm:$0xf]
    %v123 = vld [vmem:[%s2 + $0x158] sm:$0xf]
    %v124 = vld [vmem:[%s2 + $0x15c] sm:$0xf]
    %v125 = vld [vmem:[%s2 + $0x160] sm:$0xf]
    %v126 = vld [vmem:[%s2 + $0x164] sm:$0xf]
    %v127 = vld [vmem:[%s2 + $0x168] sm:$0xf]
    %v128 = vld [vmem:[%s2 + $0x16c] sm:$0xf]
    %v129 = vld [vmem:[%s2 + $0x170] sm:$0xf]
    %v130 = vld [vmem:[%s2 + $0x174] sm:$0xf]
    %v131 = vld [vmem:[%s2 + $0x178] sm:$0xf]
    %v132 = vld [vmem:[%s2 + $0x17c] sm:$0xf]
    %v133 = vld [vmem:[%s3] sm:$0x1]
    %v135 = vlaneseq
    %v136 = vshrl.u32 %v135, 7
    %v137 = vsub.s32 0, %v136
    %v138 = vrot.slane %v133, %v137
    %v146 = vunpack.c.l.b16 %v31
    %v147 = vunpack.c.h.b16 %v31
    %v148 = vunpack.c.l.b16 %v32
    %v149 = vunpack.c.h.b16 %v32
    %v150 = vunpack.c.l.b16 %v33
    %v151 = vunpack.c.h.b16 %v33
    %v152 = vunpack.c.l.b16 %v34
    %v153 = vunpack.c.h.b16 %v34
    %v154 = vunpack.c.l.b16 %v35
    %v155 = vunpack.c.h.b16 %v35
    %v156 = vunpack.c.l.b16 %v36
    %v157 = vunpack.c.h.b16 %v36
    %v158 = vpack.c.b16 %v152, %v146
    %v159 = vpack.c.b16 %v153, %v147
    %v160 = vpack.c.b16 %v154, %v148
    %v161 = vpack.c.b16 %v155, %v149
    %v162 = vpack.c.b16 %v156, %v150
    %v163 = vpack.c.b16 %v157, %v151
    %v266 = vunpack.c.l.b16 %v37
    %v267 = vunpack.c.l.b16 %v38
    %v268 = vunpack.c.l.b16 %v39
    %v269 = vunpack.c.l.b16 %v40
    %v270 = vunpack.c.l.b16 %v41
    %v271 = vunpack.c.l.b16 %v42
    %v272 = vunpack.c.l.b16 %v43
    %v273 = vunpack.c.l.b16 %v44
    %v274 = vunpack.c.l.b16 %v45
    %v275 = vunpack.c.l.b16 %v46
    %v276 = vunpack.c.l.b16 %v47
    %v277 = vunpack.c.l.b16 %v48
    %v278 = vunpack.c.l.b16 %v49
    %v279 = vunpack.c.l.b16 %v50
    %v280 = vunpack.c.l.b16 %v51
    %v281 = vunpack.c.l.b16 %v52
    %v282 = vunpack.c.l.b16 %v53
    %v283 = vunpack.c.l.b16 %v54
    %v284 = vunpack.c.l.b16 %v55
    %v285 = vunpack.c.l.b16 %v56
    %v286 = vunpack.c.l.b16 %v57
    %v287 = vunpack.c.l.b16 %v58
    %v288 = vunpack.c.l.b16 %v59
    %v289 = vunpack.c.l.b16 %v60
    %v290 = vunpack.c.l.b16 %v61
    %v291 = vunpack.c.l.b16 %v62
    %v292 = vunpack.c.l.b16 %v63
    %v293 = vunpack.c.l.b16 %v64
    %v294 = vunpack.c.l.b16 %v65
    %v295 = vunpack.c.l.b16 %v66
    %v296 = vunpack.c.l.b16 %v67
    %v297 = vunpack.c.l.b16 %v68
    %v298 = vunpack.c.l.b16 %v69
    %v299 = vunpack.c.l.b16 %v70
    %v300 = vunpack.c.l.b16 %v71
    %v301 = vunpack.c.l.b16 %v72
    %v302 = vunpack.c.l.b16 %v73
    %v303 = vunpack.c.l.b16 %v74
    %v304 = vunpack.c.l.b16 %v75
    %v305 = vunpack.c.l.b16 %v76
    %v306 = vunpack.c.l.b16 %v77
    %v307 = vunpack.c.l.b16 %v78
    %v308 = vunpack.c.l.b16 %v79
    %v309 = vunpack.c.l.b16 %v80
    %v310 = vunpack.c.l.b16 %v81
    %v311 = vunpack.c.l.b16 %v82
    %v312 = vunpack.c.l.b16 %v83
    %v313 = vunpack.c.l.b16 %v84
    %v314 = vunpack.c.l.b16 %v85
    %v315 = vunpack.c.l.b16 %v86
    %v316 = vunpack.c.l.b16 %v87
    %v317 = vunpack.c.l.b16 %v88
    %v318 = vunpack.c.l.b16 %v89
    %v319 = vunpack.c.l.b16 %v90
    %v320 = vunpack.c.l.b16 %v91
    %v321 = vunpack.c.l.b16 %v92
    %v322 = vunpack.c.l.b16 %v93
    %v323 = vunpack.c.l.b16 %v94
    %v324 = vunpack.c.l.b16 %v95
    %v325 = vunpack.c.l.b16 %v96
    %v326 = vunpack.c.l.b16 %v97
    %v327 = vunpack.c.l.b16 %v98
    %v328 = vunpack.c.l.b16 %v99
    %v329 = vunpack.c.l.b16 %v100
    %v330 = vunpack.c.l.b16 %v101
    %v331 = vunpack.c.l.b16 %v102
    %v332 = vunpack.c.l.b16 %v103
    %v333 = vunpack.c.l.b16 %v104
    %v334 = vunpack.c.l.b16 %v105
    %v335 = vunpack.c.l.b16 %v106
    %v336 = vunpack.c.l.b16 %v107
    %v337 = vunpack.c.l.b16 %v108
    %v338 = vunpack.c.l.b16 %v109
    %v339 = vunpack.c.l.b16 %v110
    %v340 = vunpack.c.l.b16 %v111
    %v341 = vunpack.c.l.b16 %v112
    %v342 = vunpack.c.l.b16 %v113
    %v343 = vunpack.c.l.b16 %v114
    %v344 = vunpack.c.l.b16 %v115
    %v345 = vunpack.c.l.b16 %v116
    %v346 = vunpack.c.l.b16 %v117
    %v347 = vunpack.c.l.b16 %v118
    %v348 = vunpack.c.l.b16 %v119
    %v349 = vunpack.c.l.b16 %v120
    %v350 = vunpack.c.l.b16 %v121
    %v351 = vunpack.c.l.b16 %v122
    %v352 = vunpack.c.l.b16 %v123
    %v353 = vunpack.c.l.b16 %v124
    %v354 = vunpack.c.l.b16 %v125
    %v355 = vunpack.c.l.b16 %v126
    %v356 = vunpack.c.l.b16 %v127
    %v357 = vunpack.c.l.b16 %v128
    %v358 = vunpack.c.l.b16 %v129
    %v359 = vunpack.c.l.b16 %v130
    %v360 = vunpack.c.l.b16 %v131
    %v361 = vunpack.c.l.b16 %v132
    %v362 = vpack.c.b16 %v267, %v266
    %v363 = vpack.c.b16 %v269, %v268
    %v364 = vpack.c.b16 %v271, %v270
    %v365 = vpack.c.b16 %v273, %v272
    %v366 = vpack.c.b16 %v275, %v274
    %v367 = vpack.c.b16 %v277, %v276
    %v368 = vpack.c.b16 %v279, %v278
    %v369 = vpack.c.b16 %v281, %v280
    %v370 = vpack.c.b16 %v283, %v282
    %v371 = vpack.c.b16 %v285, %v284
    %v372 = vpack.c.b16 %v287, %v286
    %v373 = vpack.c.b16 %v289, %v288
    %v374 = vpack.c.b16 %v291, %v290
    %v375 = vpack.c.b16 %v293, %v292
    %v376 = vpack.c.b16 %v295, %v294
    %v377 = vpack.c.b16 %v297, %v296
    %v378 = vpack.c.b16 %v299, %v298
    %v379 = vpack.c.b16 %v301, %v300
    %v380 = vpack.c.b16 %v303, %v302
    %v381 = vpack.c.b16 %v305, %v304
    %v382 = vpack.c.b16 %v307, %v306
    %v383 = vpack.c.b16 %v309, %v308
    %v384 = vpack.c.b16 %v311, %v310
    %v385 = vpack.c.b16 %v313, %v312
    %v386 = vpack.c.b16 %v315, %v314
    %v387 = vpack.c.b16 %v317, %v316
    %v388 = vpack.c.b16 %v319, %v318
    %v389 = vpack.c.b16 %v321, %v320
    %v390 = vpack.c.b16 %v323, %v322
    %v391 = vpack.c.b16 %v325, %v324
    %v392 = vpack.c.b16 %v327, %v326
    %v393 = vpack.c.b16 %v329, %v328
    %v394 = vpack.c.b16 %v331, %v330
    %v395 = vpack.c.b16 %v333, %v332
    %v396 = vpack.c.b16 %v335, %v334
    %v397 = vpack.c.b16 %v337, %v336
    %v398 = vpack.c.b16 %v339, %v338
    %v399 = vpack.c.b16 %v341, %v340
    %v400 = vpack.c.b16 %v343, %v342
    %v401 = vpack.c.b16 %v345, %v344
    %v402 = vpack.c.b16 %v347, %v346
    %v403 = vpack.c.b16 %v349, %v348
    %v404 = vpack.c.b16 %v351, %v350
    %v405 = vpack.c.b16 %v353, %v352
    %v406 = vpack.c.b16 %v355, %v354
    %v407 = vpack.c.b16 %v357, %v356
    %v408 = vpack.c.b16 %v359, %v358
    %v409 = vpack.c.b16 %v361, %v360
    %458 = vmatprep.subr.bf16.mxu0 0
    %459 = vmatpush1.bf16.msra.mxu0 %v362
    %460 = vmatprep.subr.bf16.mxu0 0
    %461 = vmatpush1.bf16.msra.mxu0 %v363
    %462 = vmatprep.subr.bf16.mxu0 0
    %463 = vmatpush1.bf16.msra.mxu0 %v364
    %464 = vmatprep.subr.bf16.mxu0 0
    %465 = vmatpush1.bf16.msra.mxu0 %v365
    %466 = vmatprep.subr.bf16.mxu0 0
    %467 = vmatpush1.bf16.msra.mxu0 %v366
    %468 = vmatprep.subr.bf16.mxu0 0
    %469 = vmatpush1.bf16.msra.mxu0 %v367
    %470 = vmatprep.subr.bf16.mxu0 0
    %471 = vmatpush1.bf16.msra.mxu0 %v368
    %472 = vmatprep.subr.bf16.mxu0 0
    %473 = vmatpush1.bf16.msra.mxu0 %v369
    %474 = vmatprep.subr.bf16.mxu0 0
    %475 = vmatpush1.bf16.msra.mxu0 %v370
    %476 = vmatprep.subr.bf16.mxu0 0
    %477 = vmatpush1.bf16.msra.mxu0 %v371
    %478 = vmatprep.subr.bf16.mxu0 0
    %479 = vmatpush1.bf16.msra.mxu0 %v372
    %480 = vmatprep.subr.bf16.mxu0 0
    %481 = vmatpush1.bf16.msra.mxu0 %v373
    %482 = vmatprep.subr.bf16.mxu0 0
    %483 = vmatpush1.bf16.msra.mxu0 %v374
    %484 = vmatprep.subr.bf16.mxu0 0
    %485 = vmatpush1.bf16.msra.mxu0 %v375
    %486 = vmatprep.subr.bf16.mxu0 0
    %487 = vmatpush1.bf16.msra.mxu0 %v376
    %488 = vmatprep.subr.bf16.mxu0 0
    %489 = vmatpush1.bf16.msra.mxu0 %v377
    %490 = vmatprep.mubr.bf16.mxu0 %v159
    %491 = vmatmul.mubr.bf16.gmra.mrb[0].mxu0 %v158
    %v492 = vpop.f32.mrb[0].mxu0
    %v493 = vadd.f32 %v138, %v492
    %v494 = vpop.f32.mrb[0].mxu0
    %v495 = vpop.f32.mrb[0].mxu0
    %v496 = vadd.f32 %v138, %v495
    %v497 = vpop.f32.mrb[0].mxu0
    %498 = vdwg.mxu0
    %499 = vmatprep.subr.bf16.mxu0 0
    %500 = vmatpush1.bf16.msra.mxu0 %v378
    %501 = vmatprep.subr.bf16.mxu0 0
    %502 = vmatpush1.bf16.msra.mxu0 %v379
    %503 = vmatprep.subr.bf16.mxu0 0
    %504 = vmatpush1.bf16.msra.mxu0 %v380
    %505 = vmatprep.subr.bf16.mxu0 0
    %506 = vmatpush1.bf16.msra.mxu0 %v381
    %507 = vmatprep.subr.bf16.mxu0 0
    %508 = vmatpush1.bf16.msra.mxu0 %v382
    %509 = vmatprep.subr.bf16.mxu0 0
    %510 = vmatpush1.bf16.msra.mxu0 %v383
    %511 = vmatprep.subr.bf16.mxu0 0
    %512 = vmatpush1.bf16.msra.mxu0 %v384
    %513 = vmatprep.subr.bf16.mxu0 0
    %514 = vmatpush1.bf16.msra.mxu0 %v385
    %515 = vmatprep.subr.bf16.mxu0 0
    %516 = vmatpush1.bf16.msra.mxu0 %v386
    %517 = vmatprep.subr.bf16.mxu0 0
    %518 = vmatpush1.bf16.msra.mxu0 %v387
    %519 = vmatprep.subr.bf16.mxu0 0
    %520 = vmatpush1.bf16.msra.mxu0 %v388
    %521 = vmatprep.subr.bf16.mxu0 0
    %522 = vmatpush1.bf16.msra.mxu0 %v389
    %523 = vmatprep.subr.bf16.mxu0 0
    %524 = vmatpush1.bf16.msra.mxu0 %v390
    %525 = vmatprep.subr.bf16.mxu0 0
    %526 = vmatpush1.bf16.msra.mxu0 %v391
    %527 = vmatprep.subr.bf16.mxu0 0
    %528 = vmatpush1.bf16.msra.mxu0 %v392
    %529 = vmatprep.subr.bf16.mxu0 0
    %530 = vmatpush1.bf16.msra.mxu0 %v393
    %531 = vmatprep.mubr.bf16.mxu0 %v161
    %532 = vmatmul.mubr.bf16.gmra.mrb[0].mxu0 %v160
    %v533 = vpop.f32.mrb[0].mxu0
    %v534 = vadd.f32 %v493, %v533
    %v535 = vpop.f32.mrb[0].mxu0
    %v536 = vpop.f32.mrb[0].mxu0
    %v537 = vadd.f32 %v496, %v536
    %v538 = vpop.f32.mrb[0].mxu0
    %539 = vdwg.mxu0
    %540 = vmatprep.subr.bf16.mxu0 0
    %541 = vmatpush1.bf16.msra.mxu0 %v394
    %542 = vmatprep.subr.bf16.mxu0 0
    %543 = vmatpush1.bf16.msra.mxu0 %v395
    %544 = vmatprep.subr.bf16.mxu0 0
    %545 = vmatpush1.bf16.msra.mxu0 %v396
    %546 = vmatprep.subr.bf16.mxu0 0
    %547 = vmatpush1.bf16.msra.mxu0 %v397
    %548 = vmatprep.subr.bf16.mxu0 0
    %549 = vmatpush1.bf16.msra.mxu0 %v398
    %550 = vmatprep.subr.bf16.mxu0 0
    %551 = vmatpush1.bf16.msra.mxu0 %v399
    %552 = vmatprep.subr.bf16.mxu0 0
    %553 = vmatpush1.bf16.msra.mxu0 %v400
    %554 = vmatprep.subr.bf16.mxu0 0
    %555 = vmatpush1.bf16.msra.mxu0 %v401
    %556 = vmatprep.subr.bf16.mxu0 0
    %557 = vmatpush1.bf16.msra.mxu0 %v402
    %558 = vmatprep.subr.bf16.mxu0 0
    %559 = vmatpush1.bf16.msra.mxu0 %v403
    %560 = vmatprep.subr.bf16.mxu0 0
    %561 = vmatpush1.bf16.msra.mxu0 %v404
    %562 = vmatprep.subr.bf16.mxu0 0
    %563 = vmatpush1.bf16.msra.mxu0 %v405
    %564 = vmatprep.subr.bf16.mxu0 0
    %565 = vmatpush1.bf16.msra.mxu0 %v406
    %566 = vmatprep.subr.bf16.mxu0 0
    %567 = vmatpush1.bf16.msra.mxu0 %v407
    %568 = vmatprep.subr.bf16.mxu0 0
    %569 = vmatpush1.bf16.msra.mxu0 %v408
    %570 = vmatprep.subr.bf16.mxu0 0
    %571 = vmatpush1.bf16.msra.mxu0 %v409
    %572 = vmatprep.mubr.bf16.mxu0 %v163
    %573 = vmatmul.mubr.bf16.gmra.mrb[0].mxu0 %v162
    %v574 = vpop.f32.mrb[0].mxu0
    %v575 = vadd.f32 %v534, %v574
    %v576 = vpop.f32.mrb[0].mxu0
    %v577 = vpop.f32.mrb[0].mxu0
    %v578 = vadd.f32 %v537, %v577
    %v579 = vpop.f32.mrb[0].mxu0
    %580 = vdwg.mxu0
    %v581 = vmax.f32 %v575, 0.0
    %v582 = vmax.f32 %v578, 0.0
    %v583 = vpack.c.bf16 %v582, %v581
    %v584 = vld [vmem:[%s4] sm:$0xf]
    %v585 = vld [vmem:[%s4 + $0x4] sm:$0xf]
    %v586 = vld [vmem:[%s4 + $0x8] sm:$0xf]
    %v587 = vld [vmem:[%s4 + $0xc] sm:$0xf]
    %v588 = vld [vmem:[%s5] sm:$0x1]
    %v590 = vlaneseq
    %v591 = vshrl.u32 %v590, 7
    %v592 = vsub.s32 0, %v591
    %v593 = vrot.slane %v588, %v592
    %v599 = vunpack.c.l.b16 %v584
    %v600 = vunpack.c.l.b16 %v585
    %v601 = vunpack.c.l.b16 %v586
    %v602 = vunpack.c.l.b16 %v587
    %v603 = vpack.c.b16 %v600, %v599
    %v604 = vpack.c.b16 %v602, %v601
    %vm607 = vcmask 261120
    %v609 = vsel %vm607, %v583, 0
    %611 = vmatprep.subr.bf16.mxu0 0
    %612 = vmatpush1.bf16.msra.mxu0 %v603
    %613 = vmatprep.subr.bf16.mxu0 0
    %614 = vmatpush1.bf16.msra.mxu0 %v604
    %615 = vmatprep.subr.bf16.mxu0 0
    %616 = vmatpush1.bf16.msra.mxu0 0
    %617 = vmatprep.subr.bf16.mxu0 0
    %618 = vmatpush1.bf16.msra.mxu0 0
    %619 = vmatprep.subr.bf16.mxu0 0
    %620 = vmatpush1.bf16.msra.mxu0 0
    %621 = vmatprep.subr.bf16.mxu0 0
    %622 = vmatpush1.bf16.msra.mxu0 0
    %623 = vmatprep.subr.bf16.mxu0 0
    %624 = vmatpush1.bf16.msra.mxu0 0
    %625 = vmatprep.subr.bf16.mxu0 0
    %626 = vmatpush1.bf16.msra.mxu0 0
    %627 = vmatprep.subr.bf16.mxu0 0
    %628 = vmatpush1.bf16.msra.mxu0 0
    %629 = vmatprep.subr.bf16.mxu0 0
    %630 = vmatpush1.bf16.msra.mxu0 0
    %631 = vmatprep.subr.bf16.mxu0 0
    %632 = vmatpush1.bf16.msra.mxu0 0
    %633 = vmatprep.subr.bf16.mxu0 0
    %634 = vmatpush1.bf16.msra.mxu0 0
    %635 = vmatprep.subr.bf16.mxu0 0
    %636 = vmatpush1.bf16.msra.mxu0 0
    %637 = vmatprep.subr.bf16.mxu0 0
    %638 = vmatpush1.bf16.msra.mxu0 0
    %639 = vmatprep.subr.bf16.mxu0 0
    %640 = vmatpush1.bf16.msra.mxu0 0
    %641 = vmatprep.subr.bf16.mxu0 0
    %642 = vmatpush1.bf16.msra.mxu0 0
    %643 = vmatprep.mubr.bf16.mxu0 0
    %644 = vmatmul.mubr.bf16.gmra.mrb[0].mxu0 %v609
    %v645 = vpop.f32.mrb[0].mxu0
    %v646 = vadd.f32 %v593, %v645
    %v647 = vpop.f32.mrb[0].mxu0
    %v648 = vpop.f32.mrb[0].mxu0
    %v649 = vadd.f32 %v593, %v648
    %v650 = vpop.f32.mrb[0].mxu0
    %651 = vdwg.mxu0
    %v652 = vld [vmem:[%s1] sm:$0xff]
    %v653 = vld [vmem:[%s1 + $0x8] sm:$0xff]
    %vm654 = vcmp.eq.s32.totalorder %v652, 0
    %vm655 = vcmp.eq.s32.totalorder %v653, 0
    %v656 = vsel %vm654, 1, 0
    %v657 = vsel %vm655, 1, 0
    %658 = vset.pattern.permute.xlu0 0
    %659 = vperm.xlu0 %658, %v656
    %v660 = vpop.permute.xlu0 %659
    %661 = vset.pattern.permute.xlu0 0
    %662 = vperm.xlu0 %661, %v657
    %v663 = vpop.permute.xlu0 %662
    %vm664 = vcmp.eq.s32.totalorder %v660, 1
    %vm665 = vcmp.eq.s32.totalorder %v663, 1
    %v666 = vsel %vm664, %v646, -inf
    %v667 = vsel %vm665, %v649, -inf
    %vm668 = vcmask 130048
    %v669 = vsel %vm668, %v666, -inf
    %v670 = vsel %vm668, %v667, -inf
    %v671 = vmax.f32 %v669, %v670
    %v672 = vrot.slane %v671, 4
    %v673 = vmax.f32 %v671, %v672
    %v674 = vrot.slane %v673, 2
    %v675 = vmax.f32 %v673, %v674
    %v676 = vrot.slane %v675, 1
    %v677 = vmax.f32 %v675, %v676
    %v678 = vld [vmem:[#allocation2] sm:$0x1]
    %v679 = vmax.f32 %v678, %v677
    %vm680 = vcmask 122880
    %681 = vst.msk [vmem:[#allocation2] sm:$0x1] %vm680, %v679
    %vm682 = vcmp.eq.s32.totalorder %v652, 1
    %vm683 = vcmp.eq.s32.totalorder %v653, 1
    %v684 = vsel %vm682, 1, 0
    %v685 = vsel %vm683, 1, 0
    %686 = vset.pattern.permute.xlu0 0
    %687 = vperm.xlu0 %686, %v684
    %v688 = vpop.permute.xlu0 %687
    %689 = vset.pattern.permute.xlu0 0
    %690 = vperm.xlu0 %689, %v685
    %v691 = vpop.permute.xlu0 %690
    %vm692 = vcmp.eq.s32.totalorder %v688, 1
    %vm693 = vcmp.eq.s32.totalorder %v691, 1
    %v694 = vsel %vm692, %v646, -inf
    %v695 = vsel %vm693, %v649, -inf
    %v696 = vsel %vm668, %v694, -inf
    %v697 = vsel %vm668, %v695, -inf
    %v698 = vmax.f32 %v696, %v697
    %v699 = vrot.slane %v698, 4
    %v700 = vmax.f32 %v698, %v699
    %v701 = vrot.slane %v700, 2
    %v702 = vmax.f32 %v700, %v701
    %v703 = vrot.slane %v702, 1
    %v704 = vmax.f32 %v702, %v703
    %v705 = vld [vmem:[#allocation2 + $0x1] sm:$0x1]
    %v706 = vmax.f32 %v705, %v704
    %707 = vst.msk [vmem:[#allocation2 + $0x1] sm:$0x1] %vm680, %v706
    // Predicated region
    $region30: #{tpu_custom_call.1} parent=1 // pred_check
      _
    $region31: #{tpu_custom_call.1} parent=1 // pred_check_branch
      %709 = sbr.rel (0) target = $region33
    $region32: #{tpu_custom_call.1} parent=1 // pred_region
      %s711 = ssub.s32 32, 32
      %712 = vsyncadd [#allocation3], %s711
      %s714 = sshll.u32 [#allocation2], 4
      %s715 = int_to_ptr.vmem [resolvable:$true] %s714
      %717 = dma.vmem_to_hbm [thread:$0]  %s715, 32, %s6, [#allocation3]
    $region33: #{tpu_custom_call.1} parent=1 // pred_fallthru
      _
    // Predicated region
    $region34: #{tpu_custom_call.1} parent=1 // pred_check
      _
    $region35: #{tpu_custom_call.1} parent=1 // pred_check_branch
      %719 = sbr.rel (0) target = $region37
    $region36: #{tpu_custom_call.1} parent=1 // pred_region
      %720 = dma.done [#allocation3], 32
    $region37: #{tpu_custom_call.1} parent=1 // pred_fallthru
      _
    %721 = vsyncpa [#allocation3], 1

</llo_original>
